<compile_context>
chip_gen: v6e
topology: v6e:2x2x1
jax: 0.10.0
libtpu: 0.0.40
codegen_flags: <defaults>
</compile_context>

<pallas_src>
import jax
import jax.numpy as jnp
from jax import lax
from jax.experimental import pallas as pl
from jax.experimental.pallas import tpu as pltpu


_COMPUTE_DTYPE = jnp.bfloat16


def _vmem_limit_bytes():
    """VMEM limit for pallas_call, derived from the chip (v7x 64MiB, else 128MiB)."""
    try:
        cap = int(pltpu.get_tpu_info().vmem_capacity_bytes)
    except Exception:
        cap = 64 << 20              # assume the smallest (v7x) if the query fails
    return min((cap * 3) // 4, 96 << 20)


# ----------------------------- 1x1 conv kernels ------------------------------

def _matmul_kernel(x_ref, w_ref, o_ref):
    # x: (TM, Cin) bf16, w: (Cin, D) bf16 -> o: (TM, D); f32 MXU accumulation.
    o_ref[...] = jnp.dot(
        x_ref[...], w_ref[...], preferred_element_type=jnp.float32
    ).astype(o_ref.dtype)


def _matmul_add_kernel(x_ref, w_ref, b_ref, o_ref):
    # o = x @ w + b, accumulated in f32.
    o_ref[...] = (
        jnp.dot(x_ref[...], w_ref[...], preferred_element_type=jnp.float32)
        + b_ref[...].astype(jnp.float32)
    ).astype(o_ref.dtype)


def conv1x1(x2d, w, add2d=None):
    """Row-tiled 1x1 conv (pure channel matmul), optionally fused with `+ add`."""
    M, Cin = x2d.shape
    D = w.shape[1]
    itemsize = jnp.dtype(x2d.dtype).itemsize
    has_add = add2d is not None
    vmem_limit = _vmem_limit_bytes()

    # VMEM bytes per streamed row: double-buffered in/out(/add) bf16 blocks plus
    # the in-kernel f32 matmul result (and f32-upcast add operand).
    per_row = (2 * (Cin + D * (2 if has_add else 1)) * itemsize
               + (2 if has_add else 1) * D * 4)
    tm = max(8, min((vmem_limit // 2) // max(per_row, 1), 8192))
    tm = (tm // 8) * 8
    if M <= tm:
        # Small pyramid level: still emit >=2 blocks when worthwhile so both
        # v7x TensorCores get work; otherwise a single full block.
        TM = ((M + 15) // 16) * 8 if M >= 1024 else M
    else:
        TM = tm
    grid = (pl.cdiv(M, TM),)

    x_spec = pl.BlockSpec((TM, Cin), lambda i: (i, 0))
    w_spec = pl.BlockSpec((Cin, D), lambda i: (0, 0))
    o_spec = pl.BlockSpec((TM, D), lambda i: (i, 0))
    params = pltpu.CompilerParams(dimension_semantics=("parallel",),
                                  vmem_limit_bytes=vmem_limit)

    if not has_add:
        return pl.pallas_call(
            _matmul_kernel,
            out_shape=jax.ShapeDtypeStruct((M, D), x2d.dtype),
            grid=grid,
            in_specs=[x_spec, w_spec],
            out_specs=o_spec,
            compiler_params=params,
        )(x2d, w)

    b_spec = pl.BlockSpec((TM, D), lambda i: (i, 0))
    return pl.pallas_call(
        _matmul_add_kernel,
        out_shape=jax.ShapeDtypeStruct((M, D), x2d.dtype),
        grid=grid,
        in_specs=[x_spec, w_spec, b_spec],
        out_specs=o_spec,
        compiler_params=params,
    )(x2d, w, add2d)


# --------------------------------- 3x3 conv ----------------------------------

def _conv3x3_kernel(cur_ref, prev_ref, next_ref, w_ref, o_ref):
    # cur : (1, TH, W, D)  current row strip
    # prev: (1, 1,  W, D)  row just above the strip (valid iff strip_id > 0)
    # next: (1, 1,  W, D)  row just below the strip (valid iff strip_id < ns-1)
    # w   : (9, D, D)      taps laid out [ky*3+kx, cin, cout]
    # o   : (1, TH, W, D)
    TH, W, D = o_ref.shape[1], o_ref.shape[2], o_ref.shape[3]
    P = TH + 2
    i = pl.program_id(1)
    ns = pl.num_programs(1)

    cur = cur_ref[0]                                        # (TH, W, D)
    zrow = jnp.zeros((1, W, D), cur.dtype)
    top = jnp.where(i > 0, prev_ref[0], zrow)               # halo row above
    bot = jnp.where(i < ns - 1, next_ref[0], zrow)          # halo row below

    # H-padded strip and its two column-shifted copies, built ONCE per strip.
    # The zero left/right border is folded into the concatenates, so every tap
    # below is a free leading-dim slice (no per-tap relayouts, no scratch zero).
    cpad = jnp.concatenate([top, cur, bot], axis=0)              # (P, W, D), kx=1
    zcol = jnp.zeros((P, 1, D), cpad.dtype)
    lpad = jnp.concatenate([zcol, cpad[:, :W - 1, :]], axis=1)   # kx = 0
    rpad = jnp.concatenate([cpad[:, 1:, :], zcol], axis=1)       # kx = 2
    shifted = (lpad, cpad, rpad)

    # 9 taps, each a single (TH*W, D) x (D, D) MXU matmul with f32 accumulation.
    acc = jnp.zeros((TH * W, D), jnp.float32)
    for ky in range(3):
        for kx in range(3):
            patch = shifted[kx][ky:ky + TH].reshape(TH * W, D)
            acc = acc + jnp.dot(patch, w_ref[ky * 3 + kx],
                                preferred_element_type=jnp.float32)

    o_ref[0] = acc.reshape(TH, W, D).astype(o_ref.dtype)


def _largest_divisor_leq(n, cap):
    cap = max(1, min(n, cap))
    for t in range(cap, 0, -1):
        if n % t == 0:
            return t
    return 1


def conv3x3_same(x_nhwc, w_taps):
    """3x3 / stride 1 / pad 1 conv, tiled into H row-strips with halo rows."""
    N, H, W, D = x_nhwc.shape
    itemsize = jnp.dtype(x_nhwc.dtype).itemsize
    vmem_limit = _vmem_limit_bytes()

    # Per output row of a strip: double-buffered in+out bf16 blocks, the three
    # padded shifted copies (bf16), and the f32 accumulator (+ one f32 temp).
    per_row = W * D * (2 * 2 * itemsize + 3 * itemsize + 8)
    th = max(1, (vmem_limit // 2) // max(per_row, 1))
    TH = _largest_divisor_leq(H, th)
    ns = H // TH

    cur_spec = pl.BlockSpec((1, TH, W, D), lambda n, i: (n, i, 0, 0))
    prev_spec = pl.BlockSpec(
        (1, 1, W, D), lambda n, i: (n, jnp.maximum(i * TH - 1, 0), 0, 0))
    next_spec = pl.BlockSpec(
        (1, 1, W, D), lambda n, i: (n, jnp.minimum((i + 1) * TH, H - 1), 0, 0))
    w_spec = pl.BlockSpec((9, D, D), lambda n, i: (0, 0, 0))

    return pl.pallas_call(
        _conv3x3_kernel,
        out_shape=jax.ShapeDtypeStruct((N, H, W, D), x_nhwc.dtype),
        grid=(N, ns),
        in_specs=[cur_spec, prev_spec, next_spec, w_spec],
        out_specs=pl.BlockSpec((1, TH, W, D), lambda n, i: (n, i, 0, 0)),
        compiler_params=pltpu.CompilerParams(
            dimension_semantics=("parallel", "parallel"),
            vmem_limit_bytes=vmem_limit),
    )(x_nhwc, x_nhwc, x_nhwc, w_taps)


# ------------------------------- FPN forward ---------------------------------

def upsample_nearest_nhwc(x, out_h, out_w):
    # PyTorch nn.Upsample(mode='nearest'): src = floor(dst * in / out).
    n, h, w, c = x.shape
    if out_h % h == 0 and out_w % w == 0:
        sy, sx = out_h // h, out_w // w
        x6 = jnp.broadcast_to(x[:, :, None, :, None, :], (n, h, sy, w, sx, c))
        return x6.reshape(n, out_h, out_w, c)
    row = (jnp.arange(out_h) * h) // out_h
    col = (jnp.arange(out_w) * w) // out_w
    return x[:, row][:, :, col]


def fpn_only_last_map(feature_maps_nchw, w1x1_list, w3x3_list):
    """Replicates FPN_only_last_map.forward.  I/O in NCHW f32, kernels in NHWC bf16."""
    out_dtype = feature_maps_nchw[0].dtype
    d = w1x1_list[0].shape[1]
    fms = [jnp.transpose(f, (0, 2, 3, 1)).astype(_COMPUTE_DTYPE)
           for f in feature_maps_nchw]                                 # NHWC bf16
    w1 = [w.astype(_COMPUTE_DTYPE) for w in w1x1_list]
    w3 = [w.astype(_COMPUTE_DTYPE) for w in w3x3_list]
    depth = len(fms)

    def apply_1x1(x_nhwc, w, add_nhwc=None):
        n, h, ww, c = x_nhwc.shape
        x2d = x_nhwc.reshape(n * h * ww, c)
        add2d = None if add_nhwc is None else add_nhwc.reshape(n * h * ww, d)
        return conv1x1(x2d, w, add2d).reshape(n, h, ww, d)

    res = apply_1x1(fms[-1], w1[-1])                  # top level: no add operand
    for i in range(depth - 1):
        tgt = fms[-2 - i]
        res_up = upsample_nearest_nhwc(res, tgt.shape[1], tgt.shape[2])
        res = apply_1x1(tgt, w1[-2 - i], add_nhwc=res_up)   # fused 1x1 + add
        res = conv3x3_same(res, w3[i])
    return jnp.transpose(res, (0, 3, 1, 2)).astype(out_dtype)          # NCHW f32


# ---------------------------- pure-JAX reference -----------------------------

def _ref_forward(feature_maps_nchw, w1x1_list, w3x3_list):
    d = w1x1_list[0].shape[1]
    depth = len(feature_maps_nchw)

    def conv(x, w_oihw, pad):
        return lax.conv_general_dilated(
            x, w_oihw, (1, 1), pad,
            dimension_numbers=("NCHW", "OIHW", "NCHW"),
            precision=lax.Precision.HIGHEST)

    def w1_oihw(w):   # (Cin, D) -> (D, Cin, 1, 1)
        return jnp.transpose(w, (1, 0))[:, :, None, None]

    def w3_oihw(w):   # (9, Cin, Cout) -> (Cout, Cin, 3, 3)
        return jnp.transpose(w.reshape(3, 3, d, d), (3, 2, 0, 1))

    def up(x, oh, ow):
        h, w = x.shape[2], x.shape[3]
        row = (jnp.arange(oh) * h) // oh
        col = (jnp.arange(ow) * w) // ow
        return x[:, :, row][:, :, :, col]

    res = conv(feature_maps_nchw[-1], w1_oihw(w1x1_list[-1]), "VALID")
    for i in range(depth - 1):
        tgt = feature_maps_nchw[-2 - i]
        res = up(res, tgt.shape[2], tgt.shape[3])
        res = res + conv(tgt, w1_oihw(w1x1_list[-2 - i]), "VALID")
        res = conv(res, w3_oihw(w3x3_list[i]), "SAME")
    return res


# ------------------------------------ main -----------------------------------

if __name__ == "__main__":
    key = jax.random.PRNGKey(0)
    depth_channels = [4, 8, 16]     # channels of the 3 pyramid levels
    spatial = [32, 16, 8]           # spatial sizes (finest -> coarsest)
    d = 32                          # FPN output channels
    N = 2

    keys = jax.random.split(key, 3 * len(depth_channels))
    k = 0
    fms, w1x1, w3x3 = [], [], []
    for c, s in zip(depth_channels, spatial):
        fms.append(jax.random.normal(keys[k], (N, c, s, s), jnp.float32)); k += 1
        w1x1.append(0.1 * jax.random.normal(keys[k], (c, d), jnp.float32)); k += 1
    for _ in range(len(depth_channels) - 1):
        w3x3.append(0.05 * jax.random.normal(keys[k], (9, d, d), jnp.float32)); k += 1

    out = jax.block_until_ready(fpn_only_last_map(fms, w1x1, w3x3))
    ref = jax.block_until_ready(_ref_forward(fms, w1x1, w3x3))

    assert out.shape == (N, d, spatial[0], spatial[0]), out.shape
    max_err = float(jnp.max(jnp.abs(out - ref)))
    # bf16 activations/weights with f32 accumulation vs f32 HIGHEST reference.
    assert jnp.allclose(out, ref, rtol=3e-2, atol=3e-2), f"max_err={max_err}"
    print("KERNEL_OK")
</pallas_src>

<mosaic_0001>
module attributes {stable_mosaic.version = 11 : i64} {
  func.func @_matmul_kernel(%arg0: i32, %arg1: memref<128x16xbf16, #tpu.memory_space<vmem>>, %arg2: memref<16x32xbf16, #tpu.memory_space<vmem>>, %arg3: memref<128x32xbf16, #tpu.memory_space<vmem>>) attributes {dimension_semantics = [#tpu.dimension_semantics<parallel>], iteration_bounds = array<i64: 1>, scalar_prefetch = 0 : i64, scratch_operands = 0 : i64, tpu.core_type = #tpu.core_type<tc>, window_params = [{transform_indices = @transform_0, window_bounds = array<i64: 128, 16>}, {pipeline_mode = #tpu.pipeline_mode<synchronous>, transform_indices = @transform_1, window_bounds = array<i64: 16, 32>}, {transform_indices = @transform_2, window_bounds = array<i64: 128, 32>}]} {
    %c0 = arith.constant 0 : index
    %c0_0 = arith.constant 0 : index
    %0 = vector.load %arg1[%c0, %c0_0] : memref<128x16xbf16, #tpu.memory_space<vmem>>, vector<128x16xbf16>
    %c0_1 = arith.constant 0 : index
    %c0_2 = arith.constant 0 : index
    %1 = vector.load %arg2[%c0_1, %c0_2] : memref<16x32xbf16, #tpu.memory_space<vmem>>, vector<16x32xbf16>
    %cst = arith.constant dense<0.000000e+00> : vector<128x32xf32>
    %2 = tpu.matmul %0, %1, %cst {dimension_numbers = #tpu.dot_dimension_numbers<[1], [0], [0], [1], [0, 0, 1, 1], [], []>} : vector<128x16xbf16>, vector<16x32xbf16>, vector<128x32xf32> -> vector<128x32xf32>
    %3 = arith.truncf %2 : vector<128x32xf32> to vector<128x32xbf16>
    %c0_3 = arith.constant 0 : index
    %c0_4 = arith.constant 0 : index
    %4 = vector.load %arg3[%c0_3, %c0_4] : memref<128x32xbf16, #tpu.memory_space<vmem>>, vector<128x32xbf16>
    tpu.vector_store %arg3[%c0_3, %c0_4], %3 {strides = array<i32>} : memref<128x32xbf16, #tpu.memory_space<vmem>>, vector<128x32xbf16>,
    return
  }
  func.func @transform_0(%arg0: i32) -> (i32, i32) {
    %c0_i32 = arith.constant 0 : i32
    %c0_i32_0 = arith.constant 0 : i32
    return %arg0, %c0_i32 : i32, i32
  }
  func.func @transform_1(%arg0: i32) -> (i32, i32) {
    %c0_i32 = arith.constant 0 : i32
    %c0_i32_0 = arith.constant 0 : i32
    %c0_i32_1 = arith.constant 0 : i32
    return %c0_i32, %c0_i32_0 : i32, i32
  }
  func.func @transform_2(%arg0: i32) -> (i32, i32) {
    %c0_i32 = arith.constant 0 : i32
    %c0_i32_0 = arith.constant 0 : i32
    return %arg0, %c0_i32 : i32, i32
  }
}

</mosaic_0001>

<llo_original>
// kernel: tpu_custom_call.1
$region0: #{tpu_custom_call.1}
  #allocation0 [shape = 'u32[]', space=smem, size = 0x4, offset = 0x4, fixed_abs, tag = 'smem constant byte address 0x4 - core index']
  #allocation1 [shape = 'u32[144,128]{1,0:T(1,128)}', space=vmem, size = 0x12000, scoped, tag = 'internal scratch']
  %s0 = inlined_call_operand.vmem [shape: bf16[128,16], index: 0, kind: input, shape index: {}]
  %s1 = inlined_call_operand.vmem [shape: bf16[16,32], index: 1, kind: input, shape index: {}]
  %s2 = inlined_call_operand.vmem [shape: bf16[128,32], index: 2, kind: output, shape index: {}]
  %s3 = sld [smem:[#allocation0]]
  $region18: #{tpu_custom_call.1} parent=0
    _
  %s5 = ssub.s32 1, %s3
  %s6 = scalar_select 0, %s5, %s3
  // Predicated region
  $region2: #{tpu_custom_call.1} parent=0 // pred_check
    _
  $region3: #{tpu_custom_call.1} parent=0 // pred_check_branch
    %8 = sbr.rel (0) target = $region5
  $region4: #{tpu_custom_call.1} parent=0 // pred_region
    _
  $region5: #{tpu_custom_call.1} parent=0 // pred_fallthru
    _
  // Predicated region
  $region6: #{tpu_custom_call.1} parent=0 // pred_check
    _
  $region7: #{tpu_custom_call.1} parent=0 // pred_check_branch
    %10 = sbr.rel (0) target = $region9
  $region8: #{tpu_custom_call.1} parent=0 // pred_region
    _
  $region9: #{tpu_custom_call.1} parent=0 // pred_fallthru
    _
  %v12 = vld [vmem:[%s0] sm:$0xf]
  %v13 = vld [vmem:[%s0 + $0x4] sm:$0xf]
  %v14 = vld [vmem:[%s0 + $0x8] sm:$0xf]
  %v15 = vld [vmem:[%s0 + $0xc] sm:$0xf]
  %v16 = vld [vmem:[%s0 + $0x10] sm:$0xf]
  %v17 = vld [vmem:[%s0 + $0x14] sm:$0xf]
  %v18 = vld [vmem:[%s0 + $0x18] sm:$0xf]
  %v19 = vld [vmem:[%s0 + $0x1c] sm:$0xf]
  %v20 = vld [vmem:[%s0 + $0x20] sm:$0xf]
  %v21 = vld [vmem:[%s0 + $0x24] sm:$0xf]
  %v22 = vld [vmem:[%s0 + $0x28] sm:$0xf]
  %v23 = vld [vmem:[%s0 + $0x2c] sm:$0xf]
  %v24 = vld [vmem:[%s0 + $0x30] sm:$0xf]
  %v25 = vld [vmem:[%s0 + $0x34] sm:$0xf]
  %v26 = vld [vmem:[%s0 + $0x38] sm:$0xf]
  %v27 = vld [vmem:[%s0 + $0x3c] sm:$0xf]
  %v28 = vld [vmem:[%s1] sm:$0xf]
  %v29 = vld [vmem:[%s1 + $0x4] sm:$0xf]
  %v46 = vunpack.c.l.b16 %v12
  %v47 = vunpack.c.l.b16 %v13
  %v48 = vunpack.c.l.b16 %v14
  %v49 = vunpack.c.l.b16 %v15
  %v50 = vunpack.c.l.b16 %v16
  %v51 = vunpack.c.l.b16 %v17
  %v52 = vunpack.c.l.b16 %v18
  %v53 = vunpack.c.l.b16 %v19
  %v54 = vunpack.c.l.b16 %v20
  %v55 = vunpack.c.l.b16 %v21
  %v56 = vunpack.c.l.b16 %v22
  %v57 = vunpack.c.l.b16 %v23
  %v58 = vunpack.c.l.b16 %v24
  %v59 = vunpack.c.l.b16 %v25
  %v60 = vunpack.c.l.b16 %v26
  %v61 = vunpack.c.l.b16 %v27
  %v62 = vpack.c.b16 %v47, %v46
  %v63 = vpack.c.b16 %v49, %v48
  %v64 = vpack.c.b16 %v51, %v50
  %v65 = vpack.c.b16 %v53, %v52
  %v66 = vpack.c.b16 %v55, %v54
  %v67 = vpack.c.b16 %v57, %v56
  %v68 = vpack.c.b16 %v59, %v58
  %v69 = vpack.c.b16 %v61, %v60
  %v72 = vunpack.c.l.b16 %v28
  %v73 = vunpack.c.l.b16 %v29
  %v74 = vpack.c.b16 %v73, %v72
  %vm76 = vcmask 130048
  %v78 = vsel %vm76, %v62, 0
  %v81 = vsel %vm76, %v63, 0
  %v84 = vsel %vm76, %v64, 0
  %v87 = vsel %vm76, %v65, 0
  %v90 = vsel %vm76, %v66, 0
  %v93 = vsel %vm76, %v67, 0
  %v96 = vsel %vm76, %v68, 0
  %v99 = vsel %vm76, %v69, 0
  %101 = vmatprep.subr.bf16.mxu0 0
  %102 = vmatpush1.bf16.msra.mxu0 0
  %103 = vmatprep.subr.bf16.mxu0 0
  %104 = vmatpush1.bf16.msra.mxu0 0
  %105 = vmatprep.subr.bf16.mxu0 0
  %106 = vmatpush1.bf16.msra.mxu0 0
  %107 = vmatprep.subr.bf16.mxu0 0
  %108 = vmatpush1.bf16.msra.mxu0 0
  %109 = vmatprep.subr.bf16.mxu0 0
  %110 = vmatpush1.bf16.msra.mxu0 0
  %111 = vmatprep.subr.bf16.mxu0 0
  %112 = vmatpush1.bf16.msra.mxu0 0
  %113 = vmatprep.subr.bf16.mxu0 0
  %114 = vmatpush1.bf16.msra.mxu0 0
  %115 = vmatprep.subr.bf16.mxu0 0
  %116 = vmatpush1.bf16.msra.mxu0 %v74
  %117 = vmatprep.subr.bf16.mxu0 0
  %118 = vmatpush2.bf16.msra.mxu0 0
  %119 = vmatprep.subr.bf16.mxu0 0
  %120 = vmatpush2.bf16.msra.mxu0 0
  %121 = vmatprep.subr.bf16.mxu0 0
  %122 = vmatpush2.bf16.msra.mxu0 0
  %123 = vmatprep.subr.bf16.mxu0 0
  %124 = vmatpush2.bf16.msra.mxu0 0
  %125 = vmatprep.subr.bf16.mxu0 0
  %126 = vmatpush2.bf16.msra.mxu0 0
  %127 = vmatprep.subr.bf16.mxu0 0
  %128 = vmatpush2.bf16.msra.mxu0 0
  %129 = vmatprep.subr.bf16.mxu0 0
  %130 = vmatpush2.bf16.msra.mxu0 0
  %131 = vmatprep.subr.bf16.mxu0 0
  %132 = vmatpush2.bf16.msra.mxu0 0
  %133 = vmatprep.mubr.bf16.mxu0 0
  %134 = vmatmul.mubr.bf16.gmra.mxu0 %v78
  %v135 = vpop.f32.mrf.mxu0
  %v136 = vadd.f32 0.0, %v135
  %v137 = vpop.f32.mrf.mxu0
  %v138 = vpop.f32.mrf.mxu0
  %v139 = vadd.f32 0.0, %v138
  %v140 = vpop.f32.mrf.mxu0
  %141 = vmatprep.mubr.bf16.mxu0 0
  %142 = vmatmul.mubr.bf16.gmra.mxu0 %v81
  %v143 = vpop.f32.mrf.mxu0
  %v144 = vadd.f32 0.0, %v143
  %v145 = vpop.f32.mrf.mxu0
  %v146 = vpop.f32.mrf.mxu0
  %v147 = vadd.f32 0.0, %v146
  %v148 = vpop.f32.mrf.mxu0
  %149 = vmatprep.mubr.bf16.mxu0 0
  %150 = vmatmul.mubr.bf16.gmra.mxu0 %v84
  %v151 = vpop.f32.mrf.mxu0
  %v152 = vadd.f32 0.0, %v151
  %v153 = vpop.f32.mrf.mxu0
  %v154 = vpop.f32.mrf.mxu0
  %v155 = vadd.f32 0.0, %v154
  %v156 = vpop.f32.mrf.mxu0
  %157 = vmatprep.mubr.bf16.mxu0 0
  %158 = vmatmul.mubr.bf16.gmra.mxu0 %v87
  %v159 = vpop.f32.mrf.mxu0
  %v160 = vadd.f32 0.0, %v159
  %v161 = vpop.f32.mrf.mxu0
  %v162 = vpop.f32.mrf.mxu0
  %v163 = vadd.f32 0.0, %v162
  %v164 = vpop.f32.mrf.mxu0
  %165 = vmatprep.mubr.bf16.mxu0 0
  %166 = vmatmul.mubr.bf16.gmra.mxu0 %v90
  %v167 = vpop.f32.mrf.mxu0
  %v168 = vadd.f32 0.0, %v167
  %v169 = vpop.f32.mrf.mxu0
  %v170 = vpop.f32.mrf.mxu0
  %v171 = vadd.f32 0.0, %v170
  %v172 = vpop.f32.mrf.mxu0
  %173 = vmatprep.mubr.bf16.mxu0 0
  %174 = vmatmul.mubr.bf16.gmra.mxu0 %v93
  %v175 = vpop.f32.mrf.mxu0
  %v176 = vadd.f32 0.0, %v175
  %v177 = vpop.f32.mrf.mxu0
  %v178 = vpop.f32.mrf.mxu0
  %v179 = vadd.f32 0.0, %v178
  %v180 = vpop.f32.mrf.mxu0
  %181 = vmatprep.mubr.bf16.mxu0 0
  %182 = vmatmul.mubr.bf16.gmra.mxu0 %v96
  %v183 = vpop.f32.mrf.mxu0
  %v184 = vadd.f32 0.0, %v183
  %v185 = vpop.f32.mrf.mxu0
  %v186 = vpop.f32.mrf.mxu0
  %v187 = vadd.f32 0.0, %v186
  %v188 = vpop.f32.mrf.mxu0
  %189 = vmatprep.mubr.bf16.mxu0 0
  %190 = vmatmul.mubr.bf16.gmra.mxu0 %v99
  %v191 = vpop.f32.mrf.mxu0
  %v192 = vadd.f32 0.0, %v191
  %v193 = vpop.f32.mrf.mxu0
  %v194 = vpop.f32.mrf.mxu0
  %v195 = vadd.f32 0.0, %v194
  %v196 = vpop.f32.mrf.mxu0
  %197 = vdwg.mxu0
  %v198 = vpack.c.bf16 %v139, %v136
  %v199 = vpack.c.bf16 %v147, %v144
  %v200 = vpack.c.bf16 %v155, %v152
  %v201 = vpack.c.bf16 %v163, %v160
  %v202 = vpack.c.bf16 %v171, %v168
  %v203 = vpack.c.bf16 %v179, %v176
  %v204 = vpack.c.bf16 %v187, %v184
  %v205 = vpack.c.bf16 %v195, %v192
  %v214 = vunpack.c.l.b16 %v198
  %v215 = vunpack.c.h.b16 %v198
  %v216 = vunpack.c.l.b16 %v199
  %v217 = vunpack.c.h.b16 %v199
  %v218 = vunpack.c.l.b16 %v200
  %v219 = vunpack.c.h.b16 %v200
  %v220 = vunpack.c.l.b16 %v201
  %v221 = vunpack.c.h.b16 %v201
  %v222 = vunpack.c.l.b16 %v202
  %v223 = vunpack.c.h.b16 %v202
  %v224 = vunpack.c.l.b16 %v203
  %v225 = vunpack.c.h.b16 %v203
  %v226 = vunpack.c.l.b16 %v204
  %v227 = vunpack.c.h.b16 %v204
  %v228 = vunpack.c.l.b16 %v205
  %v229 = vunpack.c.h.b16 %v205
  %v230 = vpack.c.b16 %v214, %v214
  %v231 = vpack.c.b16 %v215, %v215
  %v232 = vpack.c.b16 %v216, %v216
  %v233 = vpack.c.b16 %v217, %v217
  %v234 = vpack.c.b16 %v218, %v218
  %v235 = vpack.c.b16 %v219, %v219
  %v236 = vpack.c.b16 %v220, %v220
  %v237 = vpack.c.b16 %v221, %v221
  %v238 = vpack.c.b16 %v222, %v222
  %v239 = vpack.c.b16 %v223, %v223
  %v240 = vpack.c.b16 %v224, %v224
  %v241 = vpack.c.b16 %v225, %v225
  %v242 = vpack.c.b16 %v226, %v226
  %v243 = vpack.c.b16 %v227, %v227
  %v244 = vpack.c.b16 %v228, %v228
  %v245 = vpack.c.b16 %v229, %v229
  %vm262 = vcmask 257024
  %263 = vst.msk [vmem:[%s2] sm:$0xf] %vm262, %v230
  %264 = vst.msk [vmem:[%s2 + $0x4] sm:$0xf] %vm262, %v231
  %265 = vst.msk [vmem:[%s2 + $0x8] sm:$0xf] %vm262, %v232
  %266 = vst.msk [vmem:[%s2 + $0xc] sm:$0xf] %vm262, %v233
  %267 = vst.msk [vmem:[%s2 + $0x10] sm:$0xf] %vm262, %v234
  %268 = vst.msk [vmem:[%s2 + $0x14] sm:$0xf] %vm262, %v235
  %269 = vst.msk [vmem:[%s2 + $0x18] sm:$0xf] %vm262, %v236
  %270 = vst.msk [vmem:[%s2 + $0x1c] sm:$0xf] %vm262, %v237
  %271 = vst.msk [vmem:[%s2 + $0x20] sm:$0xf] %vm262, %v238
  %272 = vst.msk [vmem:[%s2 + $0x24] sm:$0xf] %vm262, %v239
  %273 = vst.msk [vmem:[%s2 + $0x28] sm:$0xf] %vm262, %v240
  %274 = vst.msk [vmem:[%s2 + $0x2c] sm:$0xf] %vm262, %v241
  %275 = vst.msk [vmem:[%s2 + $0x30] sm:$0xf] %vm262, %v242
  %276 = vst.msk [vmem:[%s2 + $0x34] sm:$0xf] %vm262, %v243
  %277 = vst.msk [vmem:[%s2 + $0x38] sm:$0xf] %vm262, %v244
  %278 = vst.msk [vmem:[%s2 + $0x3c] sm:$0xf] %vm262, %v245
  // Predicated region
  $region10: #{tpu_custom_call.1} parent=0 // pred_check
    _
  $region11: #{tpu_custom_call.1} parent=0 // pred_check_branch
    %280 = sbr.rel (0) target = $region13
  $region12: #{tpu_custom_call.1} parent=0 // pred_region
    _
  $region13: #{tpu_custom_call.1} parent=0 // pred_fallthru
    _
  // Predicated region
  $region14: #{tpu_custom_call.1} parent=0 // pred_check
    _
  $region15: #{tpu_custom_call.1} parent=0 // pred_check_branch
    %282 = sbr.rel (0) target = $region17
  $region16: #{tpu_custom_call.1} parent=0 // pred_region
    _
  $region17: #{tpu_custom_call.1} parent=0 // pred_fallthru
    _

</llo_original>
